<compile_context>
chip_gen: v6e
topology: v6e:2x2x1
jax: 0.10.0
libtpu: 0.0.40
codegen_flags: <defaults>
</compile_context>

<pallas_src>
import math

import jax
import jax.numpy as jnp
from jax.experimental import pallas as pl
from jax.experimental.pallas import tpu as pltpu


def _round_up(x: int, m: int) -> int:
    return ((x + m - 1) // m) * m


def _attention_kernel(key_ref, value_ref, query_ref, kbias_ref, qkeep_ref,
                      wk_ref, wv_ref, wq_ref, wo_ref,
                      out_ref, attn_ref):
    """Grid = (batch, query_tile, head). One head of one query tile per step."""
    h = pl.program_id(2)

    k_in = key_ref[0]                 # (S_pad, Din)   bf16, resident across t & h
    v_in = value_ref[0]               # (S_pad, Din)   bf16
    q_in = query_ref[0]               # (T_tile, Din)  bf16
    kbias = kbias_ref[0]              # (1, S_pad)     f32, 0 valid / -1e30 padded
    qkeep = qkeep_ref[0]              # (T_tile, 1)    f32, 1 valid / 0 padded

    # Leading-axis dynamic index: weights are resident once for the whole grid.
    wk = wk_ref[h]                    # (Din, depth)   bf16
    wv = wv_ref[h]                    # (Din, depth)   bf16
    wq = wq_ref[h]                    # (Din, depth)   bf16, scale pre-folded
    wo = wo_ref[h]                    # (depth, Dout_p) bf16

    # Per-head projections (MXU, f32 accumulate).
    kh = jnp.dot(k_in, wk, preferred_element_type=jnp.float32)   # (S_pad, depth)
    vh = jnp.dot(v_in, wv, preferred_element_type=jnp.float32)   # (S_pad, depth)
    qh = jnp.dot(q_in, wq, preferred_element_type=jnp.float32)   # (T_tile, depth)

    # logits[t, s] = sum_d qh[t, d] * kh[s, d]; bf16 operands, f32 accumulate.
    logits = jax.lax.dot_general(
        qh.astype(jnp.bfloat16), kh.astype(jnp.bfloat16),
        (((1,), (1,)), ((), ())),
        preferred_element_type=jnp.float32)                        # (T_tile, S_pad)
    logits = logits + kbias            # additive key-padding bias (broadcast over rows)

    # Softmax over the source dim in f32; reciprocal on the (otherwise idle) EUP.
    m = jnp.max(logits, axis=-1, keepdims=True)
    e = jnp.exp(logits - m)
    attn = e * pl.reciprocal(jnp.sum(e, axis=-1, keepdims=True), approx=True)
    # masked_fill(pad_mask_query, 0); dropout omitted (eval mode).
    attn = attn * qkeep

    # bf16 writeback -- this is the dominant HBM stream.
    attn_ref[0, 0] = attn.astype(jnp.bfloat16)

    # Head-combine + output projection fused into an accumulation over heads:
    #   output = concat_h(attn_h @ V_h) @ W_o = sum_h (attn_h @ V_h) @ W_o[h]
    head_out = jnp.dot(attn.astype(jnp.bfloat16), vh.astype(jnp.bfloat16),
                       preferred_element_type=jnp.float32)         # (T_tile, depth)
    contrib = jnp.dot(head_out.astype(jnp.bfloat16), wo,
                      preferred_element_type=jnp.float32)          # (T_tile, Dout_p)

    @pl.when(h == 0)
    def _():
        out_ref[0] = contrib

    @pl.when(h > 0)
    def _():
        out_ref[0] = out_ref[0] + contrib


def attention_forward(key, value, query, pad_mask_key, pad_mask_query,
                      wk_t, wv_t, wq_t, wo_t, *, num_heads):
    """key/value: (B,S,Din), query: (B,T,Din), masks: bool (B,S)/(B,T), True==padded.
    Weights are (in, out) transposed torch weights. Returns (output f32, attention bf16)."""
    B, S, Din = key.shape
    T = query.shape[1]
    Dout = wk_t.shape[1]
    assert Dout % num_heads == 0
    depth = Dout // num_heads
    scale = depth ** (-0.5)

    # Padding: S to 128 lanes (dense attn stores), T to 16 sublanes (bf16 pack),
    # Dout to 128 lanes (dense output-projection stores).
    S_pad = _round_up(S, 128)
    T_pad16 = _round_up(T, 16)
    T_TILE = min(256, T_pad16)
    T_pad = _round_up(T, T_TILE)
    Dout_p = _round_up(Dout, 128)

    # bf16 activations at the call boundary (halves HBM reads, native MXU rate).
    key_p = jnp.pad(key, ((0, 0), (0, S_pad - S), (0, 0))).astype(jnp.bfloat16)
    value_p = jnp.pad(value, ((0, 0), (0, S_pad - S), (0, 0))).astype(jnp.bfloat16)
    query_p = jnp.pad(query, ((0, 0), (0, T_pad - T), (0, 0))).astype(jnp.bfloat16)

    # Key mask -> additive f32 bias (0 valid, -1e30 padded); alignment cols padded.
    mk_full = jnp.pad(pad_mask_key, ((0, 0), (0, S_pad - S)), constant_values=True)
    kbias = jnp.where(mk_full, jnp.float32(-1e30), jnp.float32(0.0)).reshape(B, 1, S_pad)
    # Query mask -> multiplicative f32 keep-mask (1 valid, 0 padded).
    mq_full = jnp.pad(pad_mask_query, ((0, 0), (0, T_pad - T)), constant_values=True)
    qkeep = jnp.where(mq_full, jnp.float32(0.0), jnp.float32(1.0)).reshape(B, T_pad, 1)

    # Split weights per head along a leading axis (host side, free); fold scale; bf16.
    wk_h = wk_t.reshape(Din, num_heads, depth).transpose(1, 0, 2).astype(jnp.bfloat16)
    wv_h = wv_t.reshape(Din, num_heads, depth).transpose(1, 0, 2).astype(jnp.bfloat16)
    wq_h = (wq_t * scale).reshape(Din, num_heads, depth).transpose(1, 0, 2).astype(jnp.bfloat16)
    wo_p = jnp.pad(wo_t, ((0, 0), (0, Dout_p - Dout)))
    wo_h = wo_p.reshape(num_heads, depth, Dout_p).astype(jnp.bfloat16)

    out_shapes = (
        jax.ShapeDtypeStruct((B, T_pad, Dout_p), jnp.float32),
        jax.ShapeDtypeStruct((B, num_heads, T_pad, S_pad), jnp.bfloat16),
    )

    n_t_tiles = T_pad // T_TILE
    grid_spec = pltpu.PrefetchScalarGridSpec(
        num_scalar_prefetch=0,
        grid=(B, n_t_tiles, num_heads),
        in_specs=[
            pl.BlockSpec((1, S_pad, Din), lambda b, t, h: (b, 0, 0)),     # key
            pl.BlockSpec((1, S_pad, Din), lambda b, t, h: (b, 0, 0)),     # value
            pl.BlockSpec((1, T_TILE, Din), lambda b, t, h: (b, t, 0)),    # query tile
            pl.BlockSpec((1, 1, S_pad), lambda b, t, h: (b, 0, 0)),       # key bias
            pl.BlockSpec((1, T_TILE, 1), lambda b, t, h: (b, t, 0)),      # query keep-mask
            pl.BlockSpec((num_heads, Din, depth), lambda b, t, h: (0, 0, 0)),    # W_k (resident)
            pl.BlockSpec((num_heads, Din, depth), lambda b, t, h: (0, 0, 0)),    # W_v (resident)
            pl.BlockSpec((num_heads, Din, depth), lambda b, t, h: (0, 0, 0)),    # W_q (resident)
            pl.BlockSpec((num_heads, depth, Dout_p), lambda b, t, h: (0, 0, 0)), # W_o (resident)
        ],
        out_specs=(
            # Output block is constant across the head axis -> it IS the accumulator.
            pl.BlockSpec((1, T_TILE, Dout_p), lambda b, t, h: (b, t, 0)),
            pl.BlockSpec((1, 1, T_TILE, S_pad), lambda b, t, h: (b, h, t, 0)),
        ),
    )

    out_p, attn_p = pl.pallas_call(
        _attention_kernel,
        out_shape=out_shapes,
        grid_spec=grid_spec,
        compiler_params=pltpu.CompilerParams(
            dimension_semantics=("parallel", "parallel", "arbitrary"),
            # Safe across v5e/v6e/v7x; with T-tiling the per-step blocks are small.
            # Can be raised to ~100 MiB on v5e/v6e for larger tiles.
            vmem_limit_bytes=64 * 1024 * 1024),
    )(key_p, value_p, query_p, kbias, qkeep, wk_h, wv_h, wq_h, wo_h)

    # Strip alignment padding.
    return out_p[:, :T, :Dout], attn_p[:, :, :T, :S]


def _reference_forward(key, value, query, pad_mask_key, pad_mask_query,
                       wk_t, wv_t, wq_t, wo_t, *, num_heads):
    """Plain-JAX f32 mirror of the PyTorch module (eval mode) for verification."""
    B, S, _ = key.shape
    T = query.shape[1]
    Dout = wk_t.shape[1]
    depth = Dout // num_heads
    scale = depth ** (-0.5)

    def split(x):  # (B, L, Dout) -> (B, H, L, depth)
        L = x.shape[1]
        return x.reshape(B, L, num_heads, depth).transpose(0, 2, 1, 3)

    k = split(key @ wk_t)
    v = split(value @ wv_t)
    q = split(query @ wq_t) * scale
    logits = jnp.einsum('bhtd,bhsd->bhts', q, k)
    logits = jnp.where(pad_mask_key[:, None, None, :], -jnp.inf, logits)
    attn = jax.nn.softmax(logits, axis=-1)
    attn = jnp.where(pad_mask_query[:, None, :, None], 0.0, attn)
    out = jnp.einsum('bhts,bhsd->bhtd', attn, v)
    out = out.transpose(0, 2, 1, 3).reshape(B, T, Dout)
    out = out @ wo_t
    return out, attn


def _xavier_uniform(key, fan_in, fan_out):
    bound = math.sqrt(6.0 / (fan_in + fan_out))
    # Returns the transposed (in, out) weight directly.
    return jax.random.uniform(key, (fan_in, fan_out), jnp.float32, -bound, bound)


if __name__ == "__main__":
    B, S, T = 2, 8, 8
    INPUT_SIZE, OUTPUT_SIZE, NUM_HEADS = 16, 32, 4

    root = jax.random.PRNGKey(0)
    kk, kv, kq, kwk, kwv, kwq, kwo = jax.random.split(root, 7)

    key = jax.random.normal(kk, (B, S, INPUT_SIZE), jnp.float32)
    value = jax.random.normal(kv, (B, S, INPUT_SIZE), jnp.float32)
    query = jax.random.normal(kq, (B, T, INPUT_SIZE), jnp.float32)

    # Variable-length "sets": True == padded position.
    valid_k = jnp.array([8, 5])
    valid_q = jnp.array([8, 6])
    pad_mask_key = jnp.arange(S)[None, :] >= valid_k[:, None]     # (B, S) bool
    pad_mask_query = jnp.arange(T)[None, :] >= valid_q[:, None]   # (B, T) bool

    wk_t = _xavier_uniform(kwk, INPUT_SIZE, OUTPUT_SIZE)
    wv_t = _xavier_uniform(kwv, INPUT_SIZE, OUTPUT_SIZE)
    wq_t = _xavier_uniform(kwq, INPUT_SIZE, OUTPUT_SIZE)
    wo_t = _xavier_uniform(kwo, OUTPUT_SIZE, OUTPUT_SIZE)

    out, attn = attention_forward(key, value, query, pad_mask_key, pad_mask_query,
                                  wk_t, wv_t, wq_t, wo_t, num_heads=NUM_HEADS)
    jax.block_until_ready((out, attn))

    ref_out, ref_attn = _reference_forward(key, value, query, pad_mask_key, pad_mask_query,
                                           wk_t, wv_t, wq_t, wo_t, num_heads=NUM_HEADS)
    assert out.shape == (B, T, OUTPUT_SIZE)
    assert attn.shape == (B, NUM_HEADS, T, S)
    # Tolerances account for bf16 activations/weights/attention storage and the
    # approximate (EUP) reciprocal in the softmax; accumulation is f32 throughout.
    assert jnp.allclose(out, ref_out, atol=5e-2, rtol=5e-2)
    assert jnp.allclose(attn.astype(jnp.float32), ref_attn, atol=2e-2, rtol=2e-2)

    print("KERNEL_OK")
</pallas_src>

<mosaic_0001>
module attributes {stable_mosaic.version = 11 : i64} {
  func.func @_attention_kernel(%arg0: i32, %arg1: i32, %arg2: i32, %arg3: memref<1x128x16xbf16, #tpu.memory_space<vmem>>, %arg4: memref<1x128x16xbf16, #tpu.memory_space<vmem>>, %arg5: memref<1x16x16xbf16, #tpu.memory_space<vmem>>, %arg6: memref<1x1x128xf32, #tpu.memory_space<vmem>>, %arg7: memref<1x16x1xf32, #tpu.memory_space<vmem>>, %arg8: memref<4x16x8xbf16, #tpu.memory_space<vmem>>, %arg9: memref<4x16x8xbf16, #tpu.memory_space<vmem>>, %arg10: memref<4x16x8xbf16, #tpu.memory_space<vmem>>, %arg11: memref<4x8x128xbf16, #tpu.memory_space<vmem>>, %arg12: memref<1x16x128xf32, #tpu.memory_space<vmem>>, %arg13: memref<1x1x16x128xbf16, #tpu.memory_space<vmem>>) attributes {dimension_semantics = [#tpu.dimension_semantics<parallel>, #tpu.dimension_semantics<parallel>, #tpu.dimension_semantics<arbitrary>], iteration_bounds = array<i64: 2, 1, 4>, scalar_prefetch = 0 : i64, scratch_operands = 0 : i64, tpu.core_type = #tpu.core_type<tc>, window_params = [{transform_indices = @transform_0, window_bounds = array<i64: 1, 128, 16>}, {transform_indices = @transform_1, window_bounds = array<i64: 1, 128, 16>}, {transform_indices = @transform_2, window_bounds = array<i64: 1, 16, 16>}, {transform_indices = @transform_3, window_bounds = array<i64: 1, 1, 128>}, {transform_indices = @transform_4, window_bounds = array<i64: 1, 16, 1>}, {pipeline_mode = #tpu.pipeline_mode<synchronous>, transform_indices = @transform_5, window_bounds = array<i64: 4, 16, 8>}, {pipeline_mode = #tpu.pipeline_mode<synchronous>, transform_indices = @transform_6, window_bounds = array<i64: 4, 16, 8>}, {pipeline_mode = #tpu.pipeline_mode<synchronous>, transform_indices = @transform_7, window_bounds = array<i64: 4, 16, 8>}, {pipeline_mode = #tpu.pipeline_mode<synchronous>, transform_indices = @transform_8, window_bounds = array<i64: 4, 8, 128>}, {transform_indices = @transform_9, window_bounds = array<i64: 1, 16, 128>}, {transform_indices = @transform_10, window_bounds = array<i64: 1, 1, 16, 128>}]} {
    %c0 = arith.constant 0 : index
    %c0_0 = arith.constant 0 : index
    %c0_1 = arith.constant 0 : index
    %0 = vector.load %arg3[%c0, %c0_0, %c0_1] : memref<1x128x16xbf16, #tpu.memory_space<vmem>>, vector<1x128x16xbf16>
    %1 = vector.shape_cast %0 : vector<1x128x16xbf16> to vector<128x16xbf16>
    %c0_2 = arith.constant 0 : index
    %c0_3 = arith.constant 0 : index
    %c0_4 = arith.constant 0 : index
    %2 = vector.load %arg4[%c0_2, %c0_3, %c0_4] : memref<1x128x16xbf16, #tpu.memory_space<vmem>>, vector<1x128x16xbf16>
    %3 = vector.shape_cast %2 : vector<1x128x16xbf16> to vector<128x16xbf16>
    %c0_5 = arith.constant 0 : index
    %c0_6 = arith.constant 0 : index
    %c0_7 = arith.constant 0 : index
    %4 = vector.load %arg5[%c0_5, %c0_6, %c0_7] : memref<1x16x16xbf16, #tpu.memory_space<vmem>>, vector<1x16x16xbf16>
    %5 = vector.shape_cast %4 : vector<1x16x16xbf16> to vector<16x16xbf16>
    %c0_8 = arith.constant 0 : index
    %c0_9 = arith.constant 0 : index
    %c0_10 = arith.constant 0 : index
    %6 = vector.load %arg6[%c0_8, %c0_9, %c0_10] : memref<1x1x128xf32, #tpu.memory_space<vmem>>, vector<1x1x128xf32>
    %7 = vector.shape_cast %6 : vector<1x1x128xf32> to vector<1x128xf32>
    %c0_11 = arith.constant 0 : index
    %c0_12 = arith.constant 0 : index
    %c0_13 = arith.constant 0 : index
    %8 = vector.load %arg7[%c0_11, %c0_12, %c0_13] : memref<1x16x1xf32, #tpu.memory_space<vmem>>, vector<1x16x1xf32>
    %9 = vector.shape_cast %8 : vector<1x16x1xf32> to vector<16x1xf32>
    %10 = arith.index_cast %arg2 : i32 to index
    %c0_14 = arith.constant 0 : index
    %c0_15 = arith.constant 0 : index
    %11 = vector.load %arg8[%10, %c0_14, %c0_15] : memref<4x16x8xbf16, #tpu.memory_space<vmem>>, vector<1x16x8xbf16>
    %12 = vector.shape_cast %11 : vector<1x16x8xbf16> to vector<16x8xbf16>
    %13 = arith.index_cast %arg2 : i32 to index
    %c0_16 = arith.constant 0 : index
    %c0_17 = arith.constant 0 : index
    %14 = vector.load %arg9[%13, %c0_16, %c0_17] : memref<4x16x8xbf16, #tpu.memory_space<vmem>>, vector<1x16x8xbf16>
    %15 = vector.shape_cast %14 : vector<1x16x8xbf16> to vector<16x8xbf16>
    %16 = arith.index_cast %arg2 : i32 to index
    %c0_18 = arith.constant 0 : index
    %c0_19 = arith.constant 0 : index
    %17 = vector.load %arg10[%16, %c0_18, %c0_19] : memref<4x16x8xbf16, #tpu.memory_space<vmem>>, vector<1x16x8xbf16>
    %18 = vector.shape_cast %17 : vector<1x16x8xbf16> to vector<16x8xbf16>
    %19 = arith.index_cast %arg2 : i32 to index
    %c0_20 = arith.constant 0 : index
    %c0_21 = arith.constant 0 : index
    %20 = vector.load %arg11[%19, %c0_20, %c0_21] : memref<4x8x128xbf16, #tpu.memory_space<vmem>>, vector<1x8x128xbf16>
    %21 = vector.shape_cast %20 : vector<1x8x128xbf16> to vector<8x128xbf16>
    %cst = arith.constant dense<0.000000e+00> : vector<128x8xf32>
    %22 = tpu.matmul %1, %12, %cst {dimension_numbers = #tpu.dot_dimension_numbers<[1], [0], [0], [1], [0, 0, 1, 1], [], []>} : vector<128x16xbf16>, vector<16x8xbf16>, vector<128x8xf32> -> vector<128x8xf32>
    %cst_22 = arith.constant dense<0.000000e+00> : vector<128x8xf32>
    %23 = tpu.matmul %3, %15, %cst_22 {dimension_numbers = #tpu.dot_dimension_numbers<[1], [0], [0], [1], [0, 0, 1, 1], [], []>} : vector<128x16xbf16>, vector<16x8xbf16>, vector<128x8xf32> -> vector<128x8xf32>
    %cst_23 = arith.constant dense<0.000000e+00> : vector<16x8xf32>
    %24 = tpu.matmul %5, %18, %cst_23 {dimension_numbers = #tpu.dot_dimension_numbers<[1], [0], [0], [1], [0, 0, 1, 1], [], []>} : vector<16x16xbf16>, vector<16x8xbf16>, vector<16x8xf32> -> vector<16x8xf32>
    %25 = arith.truncf %24 : vector<16x8xf32> to vector<16x8xbf16>
    %26 = arith.truncf %22 : vector<128x8xf32> to vector<128x8xbf16>
    %cst_24 = arith.constant dense<0.000000e+00> : vector<16x128xf32>
    %27 = tpu.matmul %25, %26, %cst_24 {dimension_numbers = #tpu.dot_dimension_numbers<[1], [1], [0], [0], [0, 0, 1, 0], [], []>} : vector<16x8xbf16>, vector<128x8xbf16>, vector<16x128xf32> -> vector<16x128xf32>
    %28 = vector.broadcast %7 : vector<1x128xf32> to vector<16x128xf32>
    %29 = arith.addf %27, %28 : vector<16x128xf32>
    %cst_25 = arith.constant dense<0xFF800000> : vector<16xf32>
    %30 = vector.multi_reduction <maximumf>, %29, %cst_25 [1] : vector<16x128xf32> to vector<16xf32>
    %31 = vector.shape_cast %30 : vector<16xf32> to vector<16x1xf32>
    %32 = vector.broadcast %31 : vector<16x1xf32> to vector<16x128xf32>
    %33 = arith.subf %29, %32 : vector<16x128xf32>
    %34 = math.exp %33 : vector<16x128xf32>
    %cst_26 = arith.constant dense<0.000000e+00> : vector<16xf32>
    %35 = vector.multi_reduction <add>, %34, %cst_26 [1] : vector<16x128xf32> to vector<16xf32>
    %36 = vector.shape_cast %35 : vector<16xf32> to vector<16x1xf32>
    %37 = tpu.reciprocal %36 {approx = true} : vector<16x1xf32> -> vector<16x1xf32>
    %38 = vector.broadcast %37 : vector<16x1xf32> to vector<16x128xf32>
    %39 = arith.mulf %34, %38 : vector<16x128xf32>
    %40 = vector.broadcast %9 : vector<16x1xf32> to vector<16x128xf32>
    %41 = arith.mulf %39, %40 : vector<16x128xf32>
    %42 = arith.truncf %41 : vector<16x128xf32> to vector<16x128xbf16>
    %c0_27 = arith.constant 0 : index
    %c0_28 = arith.constant 0 : index
    %c0_29 = arith.constant 0 : index
    %c0_30 = arith.constant 0 : index
    %43 = vector.load %arg13[%c0_27, %c0_28, %c0_29, %c0_30] : memref<1x1x16x128xbf16, #tpu.memory_space<vmem>>, vector<1x1x16x128xbf16>
    %44 = vector.shape_cast %43 : vector<1x1x16x128xbf16> to vector<16x128xbf16>
    %45 = vector.shape_cast %42 : vector<16x128xbf16> to vector<1x1x16x128xbf16>
    tpu.vector_store %arg13[%c0_27, %c0_28, %c0_29, %c0_30], %45 {strides = array<i32>} : memref<1x1x16x128xbf16, #tpu.memory_space<vmem>>, vector<1x1x16x128xbf16>,
    %46 = arith.truncf %41 : vector<16x128xf32> to vector<16x128xbf16>
    %47 = arith.truncf %23 : vector<128x8xf32> to vector<128x8xbf16>
    %cst_31 = arith.constant dense<0.000000e+00> : vector<16x8xf32>
    %48 = tpu.matmul %46, %47, %cst_31 {dimension_numbers = #tpu.dot_dimension_numbers<[1], [0], [0], [1], [0, 0, 1, 1], [], []>} : vector<16x128xbf16>, vector<128x8xbf16>, vector<16x8xf32> -> vector<16x8xf32>
    %49 = arith.truncf %48 : vector<16x8xf32> to vector<16x8xbf16>
    %cst_32 = arith.constant dense<0.000000e+00> : vector<16x128xf32>
    %50 = tpu.matmul %49, %21, %cst_32 {dimension_numbers = #tpu.dot_dimension_numbers<[1], [0], [0], [1], [0, 0, 1, 1], [], []>} : vector<16x8xbf16>, vector<8x128xbf16>, vector<16x128xf32> -> vector<16x128xf32>
    %c0_i32 = arith.constant 0 : i32
    %51 = arith.cmpi eq, %arg2, %c0_i32 : i32
    %52 = arith.extui %51 : i1 to i32
    %c0_i32_33 = arith.constant 0 : i32
    %53 = arith.cmpi ne, %52, %c0_i32_33 : i32
    scf.if %53 {
      %c0_36 = arith.constant 0 : index
      %c0_37 = arith.constant 0 : index
      %c0_38 = arith.constant 0 : index
      %57 = vector.load %arg12[%c0_36, %c0_37, %c0_38] : memref<1x16x128xf32, #tpu.memory_space<vmem>>, vector<1x16x128xf32>
      %58 = vector.shape_cast %57 : vector<1x16x128xf32> to vector<16x128xf32>
      %59 = vector.shape_cast %50 : vector<16x128xf32> to vector<1x16x128xf32>
      tpu.vector_store %arg12[%c0_36, %c0_37, %c0_38], %59 {strides = array<i32>} : memref<1x16x128xf32, #tpu.memory_space<vmem>>, vector<1x16x128xf32>,
    } else {
    }
    %c0_i32_34 = arith.constant 0 : i32
    %54 = arith.cmpi sgt, %arg2, %c0_i32_34 : i32
    %55 = arith.extui %54 : i1 to i32
    %c0_i32_35 = arith.constant 0 : i32
    %56 = arith.cmpi ne, %55, %c0_i32_35 : i32
    scf.if %56 {
      %c0_36 = arith.constant 0 : index
      %c0_37 = arith.constant 0 : index
      %c0_38 = arith.constant 0 : index
      %57 = vector.load %arg12[%c0_36, %c0_37, %c0_38] : memref<1x16x128xf32, #tpu.memory_space<vmem>>, vector<1x16x128xf32>
      %58 = vector.shape_cast %57 : vector<1x16x128xf32> to vector<16x128xf32>
      %59 = arith.addf %58, %50 : vector<16x128xf32>
      %c0_39 = arith.constant 0 : index
      %c0_40 = arith.constant 0 : index
      %c0_41 = arith.constant 0 : index
      %60 = vector.load %arg12[%c0_39, %c0_40, %c0_41] : memref<1x16x128xf32, #tpu.memory_space<vmem>>, vector<1x16x128xf32>
      %61 = vector.shape_cast %60 : vector<1x16x128xf32> to vector<16x128xf32>
      %62 = vector.shape_cast %59 : vector<16x128xf32> to vector<1x16x128xf32>
      tpu.vector_store %arg12[%c0_39, %c0_40, %c0_41], %62 {strides = array<i32>} : memref<1x16x128xf32, #tpu.memory_space<vmem>>, vector<1x16x128xf32>,
    } else {
    }
    return
  }
  func.func @transform_0(%arg0: i32, %arg1: i32, %arg2: i32) -> (i32, i32, i32) {
    %c0_i32 = arith.constant 0 : i32
    %c0_i32_0 = arith.constant 0 : i32
    %c0_i32_1 = arith.constant 0 : i32
    return %arg0, %c0_i32, %c0_i32_0 : i32, i32, i32
  }
  func.func @transform_1(%arg0: i32, %arg1: i32, %arg2: i32) -> (i32, i32, i32) {
    %c0_i32 = arith.constant 0 : i32
    %c0_i32_0 = arith.constant 0 : i32
    %c0_i32_1 = arith.constant 0 : i32
    return %arg0, %c0_i32, %c0_i32_0 : i32, i32, i32
  }
  func.func @transform_2(%arg0: i32, %arg1: i32, %arg2: i32) -> (i32, i32, i32) {
    %c0_i32 = arith.constant 0 : i32
    %c0_i32_0 = arith.constant 0 : i32
    return %arg0, %arg1, %c0_i32 : i32, i32, i32
  }
  func.func @transform_3(%arg0: i32, %arg1: i32, %arg2: i32) -> (i32, i32, i32) {
    %c0_i32 = arith.constant 0 : i32
    %c0_i32_0 = arith.constant 0 : i32
    %c0_i32_1 = arith.constant 0 : i32
    return %arg0, %c0_i32, %c0_i32_0 : i32, i32, i32
  }
  func.func @transform_4(%arg0: i32, %arg1: i32, %arg2: i32) -> (i32, i32, i32) {
    %c0_i32 = arith.constant 0 : i32
    %c0_i32_0 = arith.constant 0 : i32
    return %arg0, %arg1, %c0_i32 : i32, i32, i32
  }
  func.func @transform_5(%arg0: i32, %arg1: i32, %arg2: i32) -> (i32, i32, i32) {
    %c0_i32 = arith.constant 0 : i32
    %c0_i32_0 = arith.constant 0 : i32
    %c0_i32_1 = arith.constant 0 : i32
    %c0_i32_2 = arith.constant 0 : i32
    return %c0_i32, %c0_i32_0, %c0_i32_1 : i32, i32, i32
  }
  func.func @transform_6(%arg0: i32, %arg1: i32, %arg2: i32) -> (i32, i32, i32) {
    %c0_i32 = arith.constant 0 : i32
    %c0_i32_0 = arith.constant 0 : i32
    %c0_i32_1 = arith.constant 0 : i32
    %c0_i32_2 = arith.constant 0 : i32
    return %c0_i32, %c0_i32_0, %c0_i32_1 : i32, i32, i32
  }
  func.func @transform_7(%arg0: i32, %arg1: i32, %arg2: i32) -> (i32, i32, i32) {
    %c0_i32 = arith.constant 0 : i32
    %c0_i32_0 = arith.constant 0 : i32
    %c0_i32_1 = arith.constant 0 : i32
    %c0_i32_2 = arith.constant 0 : i32
    return %c0_i32, %c0_i32_0, %c0_i32_1 : i32, i32, i32
  }
  func.func @transform_8(%arg0: i32, %arg1: i32, %arg2: i32) -> (i32, i32, i32) {
    %c0_i32 = arith.constant 0 : i32
    %c0_i32_0 = arith.constant 0 : i32
    %c0_i32_1 = arith.constant 0 : i32
    %c0_i32_2 = arith.constant 0 : i32
    return %c0_i32, %c0_i32_0, %c0_i32_1 : i32, i32, i32
  }
  func.func @transform_9(%arg0: i32, %arg1: i32, %arg2: i32) -> (i32, i32, i32) {
    %c0_i32 = arith.constant 0 : i32
    %c0_i32_0 = arith.constant 0 : i32
    return %arg0, %arg1, %c0_i32 : i32, i32, i32
  }
  func.func @transform_10(%arg0: i32, %arg1: i32, %arg2: i32) -> (i32, i32, i32, i32) {
    %c0_i32 = arith.constant 0 : i32
    %c0_i32_0 = arith.constant 0 : i32
    return %arg0, %arg2, %arg1, %c0_i32 : i32, i32, i32, i32
  }
}

</mosaic_0001>

<llo_original>
// kernel: tpu_custom_call.1
$region0: #{tpu_custom_call.1}
  #allocation0 [shape = 'u32[]', space=smem, size = 0x4, offset = 0x4, fixed_abs, tag = 'smem constant byte address 0x4 - core index']
  #allocation1 [shape = 'u32[144,128]{1,0:T(1,128)}', space=vmem, size = 0x12000, scoped, tag = 'internal scratch']
  %s0 = inlined_call_operand.vmem [shape: bf16[2,128,16], index: 0, kind: input, shape index: {}]
  %s1 = inlined_call_operand.vmem [shape: bf16[2,128,16], index: 1, kind: input, shape index: {}]
  %s2 = inlined_call_operand.vmem [shape: bf16[2,16,16], index: 2, kind: input, shape index: {}]
  %s3 = inlined_call_operand.vmem [shape: f32[2,1,128], index: 3, kind: input, shape index: {}]
  %s4 = inlined_call_operand.vmem [shape: f32[2,16,1], index: 4, kind: input, shape index: {}]
  %s5 = inlined_call_operand.vmem [shape: bf16[4,16,8], index: 5, kind: input, shape index: {}]
  %s6 = inlined_call_operand.vmem [shape: bf16[4,16,8], index: 6, kind: input, shape index: {}]
  %s7 = inlined_call_operand.vmem [shape: bf16[4,16,8], index: 7, kind: input, shape index: {}]
  %s8 = inlined_call_operand.vmem [shape: bf16[4,8,128], index: 8, kind: input, shape index: {}]
  %s9 = inlined_call_operand.hbm [shape: f32[2,16,128], index: 9, kind: output, shape index: {0}]
  %s10 = inlined_call_operand.hbm [shape: bf16[2,4,16,128], index: 10, kind: output, shape index: {1}]
  %11 = xla_tuple %s9, %s10
  %s12 = sld [smem:[#allocation0]]
  $region85: #{tpu_custom_call.1} parent=0
    _
  %s14 = ssub.s32 1, %s12
  %s15 = scalar_select 0, %s14, %s12
  $region1: #{tpu_custom_call.1} parent=0
    #allocation2 [shape = 'u8[16384]{0}', space=vmem, size = 0x4000, scoped, tag = 'output window, operand 0']
    #allocation3 [shape = 's32[2]{0}', space=sflag, size = 0x8, scoped, tag = 'scoped memory for tpu_custom_call.1']
    #allocation4 [shape = 'u8[8192]{0}', space=vmem, size = 0x2000, scoped, tag = 'output window, operand 1']
    #allocation5 [shape = 's32[2]{0}', space=sflag, size = 0x8, scoped, tag = 'scoped memory for tpu_custom_call.1']
    %16 = vsyncpa [#allocation3], 0
    %s17 = scalar_lea.sflag [#allocation3], 1
    %18 = vsyncpa %s17, 0
    %19 = vsyncpa [#allocation5], 0
    %s20 = scalar_lea.sflag [#allocation5], 1
    %21 = vsyncpa %s20, 0
    loop: start=0, step=1, limit=10
    $region2: #{tpu_custom_call.1} parent=1 // loop_pre_header
      _
    $region3: #{tpu_custom_call.1} parent=1 // loop_header
      %s23 = sphi 0, %s27
      %p24 = scmp.ge.s32.totalorder %s23, 10
      %s30 = sphi 0, %s49
      %s31 = sphi 0, %s45
      %s32 = sphi 0, %s41
      %s33 = sphi 0, %s30
      %s34 = sphi 0, %s31
      %s35 = sphi 0, %s32
      %s36 = sphi 0, %s33
      %s37 = sphi 0, %s34
      %s38 = sphi 0, %s35
      %s52 = sphi 0, %s54
      %s55 = sphi 0, %s52
      %s56 = sphi 0, %s55
      %s72 = sphi 0, %s56
      %s78 = sphi 0, %s80
      %s81 = sphi 0, %s78
      %s82 = sphi 0, %s81
      %s98 = sphi 0, %s82
      %s106 = sphi 0, %s108
      %s109 = sphi 0, %s106
      %s110 = sphi 0, %s109
      %s126 = sphi 0, %s110
      %s132 = sphi 0, %s134
      %s135 = sphi 0, %s132
      %s136 = sphi 0, %s135
      %s152 = sphi 0, %s136
      %s160 = sphi 0, %s162
      %s163 = sphi 0, %s160
      %s164 = sphi 0, %s163
      %s180 = sphi 0, %s164
      %s184 = sphi 0, %s184
      %s186 = sphi 0, %s184
      %s187 = sphi 0, %s186
      %s201 = sphi 0, %s187
      %s205 = sphi 0, %s205
      %s207 = sphi 0, %s205
      %s208 = sphi 0, %s207
      %s222 = sphi 0, %s208
      %s226 = sphi 0, %s226
      %s228 = sphi 0, %s226
      %s229 = sphi 0, %s228
      %s243 = sphi 0, %s229
      %s247 = sphi 0, %s247
      %s249 = sphi 0, %s247
      %s250 = sphi 0, %s249
      %s264 = sphi 0, %s250
      %s272 = sphi 0, %s274
      %s275 = sphi 0, %s272
      %s276 = sphi 0, %s275
      %s292 = sphi 0, %s276
      %s302 = sphi 0, %s304
      %s305 = sphi 0, %s302
      %s306 = sphi 0, %s305
      %s322 = sphi 0, %s306
    $region4: #{tpu_custom_call.1} parent=1 // loop_header_branch
      %26 = sbr.rel (%p24) target = $region8
    $region5: #{tpu_custom_call.1} parent=1 // loop_body
      %s28 = ssub.s32 %s23, 1
      %s29 = ssub.s32 %s23, 2
      %s39 = sadd.s32 1, %s32
      %p40 = scmp.ge.s32.totalorder %s39, 4
      %s41 = scalar_select %p40, 0, %s39
      %s42 = sadd.s32 1, %s31
      %s43 = scalar_select %p40, %s42, %s31
      %p44 = scmp.ge.s32.totalorder %s43, 1
      %s45 = scalar_select %p44, 0, %s43
      %s46 = sadd.s32 1, %s30
      %s47 = scalar_select %p44, %s46, %s30
      %p48 = scmp.ge.s32.totalorder %s47, 2
      %s49 = scalar_select %p48, 0, %s47
      %s50 = ssub.s32 %s30, %s49
      %p51 = scmp.eq.s32.totalorder %s50, 0
      %s53 = sadd.s32 %s52, 1
      %s54 = scalar_select %p51, %s52, %s53
      %p57 = pneg %p51
      %p58 = scmp.eq.s32.totalorder %s23, 7
      %p59 = por %p57, %p58
      %p60 = scmp.ne.s32.totalorder %s52, %s55
      %p61 = scmp.eq.s32.totalorder %s23, 0
      %p62 = por %p60, %p61
      %p63 = scmp.ne.s32.totalorder %s52, %s55
      %p64 = scmp.eq.s32.totalorder %s28, 7
      %p65 = por %p63, %p64
      %p66 = scmp.ne.s32.totalorder %s55, %s56
      %p67 = scmp.eq.s32.totalorder %s28, 0
      %p68 = por %p66, %p67
      %p69 = scmp.ne.s32.totalorder %s55, %s56
      %p70 = scmp.eq.s32.totalorder %s29, 7
      %p71 = por %p69, %p70
      %p73 = scmp.ne.s32.totalorder %s56, %s72
      %p74 = scmp.eq.s32.totalorder %s29, 0
      %p75 = por %p73, %p74
      %s76 = ssub.s32 %s30, %s49
      %p77 = scmp.eq.s32.totalorder %s76, 0
      %s79 = sadd.s32 %s78, 1
      %s80 = scalar_select %p77, %s78, %s79
      %p83 = pneg %p77
      %p84 = scmp.eq.s32.totalorder %s23, 7
      %p85 = por %p83, %p84
      %p86 = scmp.ne.s32.totalorder %s78, %s81
      %p87 = scmp.eq.s32.totalorder %s23, 0
      %p88 = por %p86, %p87
      %p89 = scmp.ne.s32.totalorder %s78, %s81
      %p90 = scmp.eq.s32.totalorder %s28, 7
      %p91 = por %p89, %p90
      %p92 = scmp.ne.s32.totalorder %s81, %s82
      %p93 = scmp.eq.s32.totalorder %s28, 0
      %p94 = por %p92, %p93
      %p95 = scmp.ne.s32.totalorder %s81, %s82
      %p96 = scmp.eq.s32.totalorder %s29, 7
      %p97 = por %p95, %p96
      %p99 = scmp.ne.s32.totalorder %s82, %s98
      %p100 = scmp.eq.s32.totalorder %s29, 0
      %p101 = por %p99, %p100
      %s102 = ssub.s32 %s30, %s49
      %s103 = ssub.s32 %s31, %s45
      %s104 = sor.u32 %s102, %s103
      %p105 = scmp.eq.s32.totalorder %s104, 0
      %s107 = sadd.s32 %s106, 1
      %s108 = scalar_select %p105, %s106, %s107
      %p111 = pneg %p105
      %p112 = scmp.eq.s32.totalorder %s23, 7
      %p113 = por %p111, %p112
      %p114 = scmp.ne.s32.totalorder %s106, %s109
      %p115 = scmp.eq.s32.totalorder %s23, 0
      %p116 = por %p114, %p115
      %p117 = scmp.ne.s32.totalorder %s106, %s109
      %p118 = scmp.eq.s32.totalorder %s28, 7
      %p119 = por %p117, %p118
      %p120 = scmp.ne.s32.totalorder %s109, %s110
      %p121 = scmp.eq.s32.totalorder %s28, 0
      %p122 = por %p120, %p121
      %p123 = scmp.ne.s32.totalorder %s109, %s110
      %p124 = scmp.eq.s32.totalorder %s29, 7
      %p125 = por %p123, %p124
      %p127 = scmp.ne.s32.totalorder %s110, %s126
      %p128 = scmp.eq.s32.totalorder %s29, 0
      %p129 = por %p127, %p128
      %s130 = ssub.s32 %s30, %s49
      %p131 = scmp.eq.s32.totalorder %s130, 0
      %s133 = sadd.s32 %s132, 1
      %s134 = scalar_select %p131, %s132, %s133
      %p137 = pneg %p131
      %p138 = scmp.eq.s32.totalorder %s23, 7
      %p139 = por %p137, %p138
      %p140 = scmp.ne.s32.totalorder %s132, %s135
      %p141 = scmp.eq.s32.totalorder %s23, 0
      %p142 = por %p140, %p141
      %p143 = scmp.ne.s32.totalorder %s132, %s135
      %p144 = scmp.eq.s32.totalorder %s28, 7
      %p145 = por %p143, %p144
      %p146 = scmp.ne.s32.totalorder %s135, %s136
      %p147 = scmp.eq.s32.totalorder %s28, 0
      %p148 = por %p146, %p147
      %p149 = scmp.ne.s32.totalorder %s135, %s136
      %p150 = scmp.eq.s32.totalorder %s29, 7
      %p151 = por %p149, %p150
      %p153 = scmp.ne.s32.totalorder %s136, %s152
      %p154 = scmp.eq.s32.totalorder %s29, 0
      %p155 = por %p153, %p154
      %s156 = ssub.s32 %s30, %s49
      %s157 = ssub.s32 %s31, %s45
      %s158 = sor.u32 %s156, %s157
      %p159 = scmp.eq.s32.totalorder %s158, 0
      %s161 = sadd.s32 %s160, 1
      %s162 = scalar_select %p159, %s160, %s161
      %p165 = pneg %p159
      %p166 = scmp.eq.s32.totalorder %s23, 7
      %p167 = por %p165, %p166
      %p168 = scmp.ne.s32.totalorder %s160, %s163
      %p169 = scmp.eq.s32.totalorder %s23, 0
      %p170 = por %p168, %p169
      %p171 = scmp.ne.s32.totalorder %s160, %s163
      %p172 = scmp.eq.s32.totalorder %s28, 7
      %p173 = por %p171, %p172
      %p174 = scmp.ne.s32.totalorder %s163, %s164
      %p175 = scmp.eq.s32.totalorder %s28, 0
      %p176 = por %p174, %p175
      %p177 = scmp.ne.s32.totalorder %s163, %s164
      %p178 = scmp.eq.s32.totalorder %s29, 7
      %p179 = por %p177, %p178
      %p181 = scmp.ne.s32.totalorder %s164, %s180
      %p182 = scmp.eq.s32.totalorder %s29, 0
      %p183 = por %p181, %p182
      %s185 = sadd.s32 %s184, 1
      %p188 = scmp.eq.s32.totalorder %s23, 7
      %p189 = scmp.ne.s32.totalorder %s184, %s186
      %p190 = scmp.eq.s32.totalorder %s23, 0
      %p191 = por %p189, %p190
      %p192 = scmp.ne.s32.totalorder %s184, %s186
      %p193 = scmp.eq.s32.totalorder %s28, 7
      %p194 = por %p192, %p193
      %p195 = scmp.ne.s32.totalorder %s186, %s187
      %p196 = scmp.eq.s32.totalorder %s28, 0
      %p197 = por %p195, %p196
      %p198 = scmp.ne.s32.totalorder %s186, %s187
      %p199 = scmp.eq.s32.totalorder %s29, 7
      %p200 = por %p198, %p199
      %p202 = scmp.ne.s32.totalorder %s187, %s201
      %p203 = scmp.eq.s32.totalorder %s29, 0
      %p204 = por %p202, %p203
      %s206 = sadd.s32 %s205, 1
      %p209 = scmp.eq.s32.totalorder %s23, 7
      %p210 = scmp.ne.s32.totalorder %s205, %s207
      %p211 = scmp.eq.s32.totalorder %s23, 0
      %p212 = por %p210, %p211
      %p213 = scmp.ne.s32.totalorder %s205, %s207
      %p214 = scmp.eq.s32.totalorder %s28, 7
      %p215 = por %p213, %p214
      %p216 = scmp.ne.s32.totalorder %s207, %s208
      %p217 = scmp.eq.s32.totalorder %s28, 0
      %p218 = por %p216, %p217
      %p219 = scmp.ne.s32.totalorder %s207, %s208
      %p220 = scmp.eq.s32.totalorder %s29, 7
      %p221 = por %p219, %p220
      %p223 = scmp.ne.s32.totalorder %s208, %s222
      %p224 = scmp.eq.s32.totalorder %s29, 0
      %p225 = por %p223, %p224
      %s227 = sadd.s32 %s226, 1
      %p230 = scmp.eq.s32.totalorder %s23, 7
      %p231 = scmp.ne.s32.totalorder %s226, %s228
      %p232 = scmp.eq.s32.totalorder %s23, 0
      %p233 = por %p231, %p232
      %p234 = scmp.ne.s32.totalorder %s226, %s228
      %p235 = scmp.eq.s32.totalorder %s28, 7
      %p236 = por %p234, %p235
      %p237 = scmp.ne.s32.totalorder %s228, %s229
      %p238 = scmp.eq.s32.totalorder %s28, 0
      %p239 = por %p237, %p238
      %p240 = scmp.ne.s32.totalorder %s228, %s229
      %p241 = scmp.eq.s32.totalorder %s29, 7
      %p242 = por %p240, %p241
      %p244 = scmp.ne.s32.totalorder %s229, %s243
      %p245 = scmp.eq.s32.totalorder %s29, 0
      %p246 = por %p244, %p245
      %s248 = sadd.s32 %s247, 1
      %p251 = scmp.eq.s32.totalorder %s23, 7
      %p252 = scmp.ne.s32.totalorder %s247, %s249
      %p253 = scmp.eq.s32.totalorder %s23, 0
      %p254 = por %p252, %p253
      %p255 = scmp.ne.s32.totalorder %s247, %s249
      %p256 = scmp.eq.s32.totalorder %s28, 7
      %p257 = por %p255, %p256
      %p258 = scmp.ne.s32.totalorder %s249, %s250
      %p259 = scmp.eq.s32.totalorder %s28, 0
      %p260 = por %p258, %p259
      %p261 = scmp.ne.s32.totalorder %s249, %s250
      %p262 = scmp.eq.s32.totalorder %s29, 7
      %p263 = por %p261, %p262
      %p265 = scmp.ne.s32.totalorder %s250, %s264
      %p266 = scmp.eq.s32.totalorder %s29, 0
      %p267 = por %p265, %p266
      %s268 = ssub.s32 %s30, %s49
      %s269 = ssub.s32 %s31, %s45
      %s270 = sor.u32 %s268, %s269
      %p271 = scmp.eq.s32.totalorder %s270, 0
      %s273 = sadd.s32 %s272, 1
      %s274 = scalar_select %p271, %s272, %s273
      %p277 = pneg %p271
      %p278 = scmp.eq.s32.totalorder %s23, 7
      %p279 = por %p277, %p278
      %p280 = scmp.ne.s32.totalorder %s272, %s275
      %p281 = scmp.eq.s32.totalorder %s23, 0
      %p282 = por %p280, %p281
      %p283 = scmp.ne.s32.totalorder %s272, %s275
      %p284 = scmp.eq.s32.totalorder %s28, 7
      %p285 = por %p283, %p284
      %p286 = scmp.ne.s32.totalorder %s275, %s276
      %p287 = scmp.eq.s32.totalorder %s28, 0
      %p288 = por %p286, %p287
      %p289 = scmp.ne.s32.totalorder %s275, %s276
      %p290 = scmp.eq.s32.totalorder %s29, 7
      %p291 = por %p289, %p290
      %p293 = scmp.ne.s32.totalorder %s276, %s292
      %p294 = scmp.eq.s32.totalorder %s29, 0
      %p295 = por %p293, %p294
      %s296 = ssub.s32 %s30, %s49
      %s297 = ssub.s32 %s32, %s41
      %s298 = sor.u32 %s296, %s297
      %s299 = ssub.s32 %s31, %s45
      %s300 = sor.u32 %s298, %s299
      %p301 = scmp.eq.s32.totalorder %s300, 0
      %s303 = sadd.s32 %s302, 1
      %s304 = scalar_select %p301, %s302, %s303
      %p307 = pneg %p301
      %p308 = scmp.eq.s32.totalorder %s23, 7
      %p309 = por %p307, %p308
      %p310 = scmp.ne.s32.totalorder %s302, %s305
      %p311 = scmp.eq.s32.totalorder %s23, 0
      %p312 = por %p310, %p311
      %p313 = scmp.ne.s32.totalorder %s302, %s305
      %p314 = scmp.eq.s32.totalorder %s28, 7
      %p315 = por %p313, %p314
      %p316 = scmp.ne.s32.totalorder %s305, %s306
      %p317 = scmp.eq.s32.totalorder %s28, 0
      %p318 = por %p316, %p317
      %p319 = scmp.ne.s32.totalorder %s305, %s306
      %p320 = scmp.eq.s32.totalorder %s29, 7
      %p321 = por %p319, %p320
      %p323 = scmp.ne.s32.totalorder %s306, %s322
      %p324 = scmp.eq.s32.totalorder %s29, 0
      %p325 = por %p323, %p324
      %p326 = scmp.le.s32.totalorder 1, %s23
      %p327 = scmp.lt.s32.totalorder %s23, 9
      %p328 = pnand %p326, %p327
      %p329 = pneg %p328
      // Predicated region
      $region9: #{tpu_custom_call.1} parent=5 // pred_check
        _
      $region10: #{tpu_custom_call.1} parent=5 // pred_check_branch
        %331 = sbr.rel (%p328) target = $region12
      $region11: #{tpu_custom_call.1} parent=5 // pred_region
        %s332 = ssub.s32 %s23, 1
        // Predicated region
        $region13: #{tpu_custom_call.1} parent=11 // pred_check
          %p333 = pneg %p197
        $region14: #{tpu_custom_call.1} parent=11 // pred_check_branch
          %335 = sbr.rel (%p333) target = $region16
        $region15: #{tpu_custom_call.1} parent=11 // pred_region
          _
        $region16: #{tpu_custom_call.1} parent=11 // pred_fallthru
          _
        // Predicated region
        $region17: #{tpu_custom_call.1} parent=11 // pred_check
          %p336 = pneg %p218
        $region18: #{tpu_custom_call.1} parent=11 // pred_check_branch
          %338 = sbr.rel (%p336) target = $region20
        $region19: #{tpu_custom_call.1} parent=11 // pred_region
          _
        $region20: #{tpu_custom_call.1} parent=11 // pred_fallthru
          _
        // Predicated region
        $region21: #{tpu_custom_call.1} parent=11 // pred_check
          %p339 = pneg %p239
        $region22: #{tpu_custom_call.1} parent=11 // pred_check_branch
          %341 = sbr.rel (%p339) target = $region24
        $region23: #{tpu_custom_call.1} parent=11 // pred_region
          _
        $region24: #{tpu_custom_call.1} parent=11 // pred_fallthru
          _
        // Predicated region
        $region25: #{tpu_custom_call.1} parent=11 // pred_check
          %p342 = pneg %p260
        $region26: #{tpu_custom_call.1} parent=11 // pred_check_branch
          %344 = sbr.rel (%p342) target = $region28
        $region27: #{tpu_custom_call.1} parent=11 // pred_region
          _
        $region28: #{tpu_custom_call.1} parent=11 // pred_fallthru
          _
      $region12: #{tpu_custom_call.1} parent=5 // pred_fallthru
        _
      %p345 = scmp.lt.s32.totalorder %s23, 8
      // Predicated region
      $region29: #{tpu_custom_call.1} parent=5 // pred_check
        %p346 = pneg %p345
      $region30: #{tpu_custom_call.1} parent=5 // pred_check_branch
        %348 = sbr.rel (%p346) target = $region32
      $region31: #{tpu_custom_call.1} parent=5 // pred_region
        // Predicated region
        $region33: #{tpu_custom_call.1} parent=31 // pred_check
          %p349 = pneg %p62
        $region34: #{tpu_custom_call.1} parent=31 // pred_check_branch
          %351 = sbr.rel (%p349) target = $region36
        $region35: #{tpu_custom_call.1} parent=31 // pred_region
          %p352 = scmp.lt.s32.totalorder %s30, 1
          %s353 = scalar_select %p352, %s30, 1
          %s354 = smul.addr %s353, 16
          %s355 = smul.addr %s354, 4
          %s356 = scalar_lea.vmem %s0, %s355
        $region36: #{tpu_custom_call.1} parent=31 // pred_fallthru
          _
        // Predicated region
        $region37: #{tpu_custom_call.1} parent=31 // pred_check
          %p357 = pneg %p88
        $region38: #{tpu_custom_call.1} parent=31 // pred_check_branch
          %359 = sbr.rel (%p357) target = $region40
        $region39: #{tpu_custom_call.1} parent=31 // pred_region
          %p360 = scmp.lt.s32.totalorder %s30, 1
          %s361 = scalar_select %p360, %s30, 1
          %s362 = smul.addr %s361, 16
          %s363 = smul.addr %s362, 4
          %s364 = scalar_lea.vmem %s1, %s363
        $region40: #{tpu_custom_call.1} parent=31 // pred_fallthru
          _
        // Predicated region
        $region41: #{tpu_custom_call.1} parent=31 // pred_check
          %p365 = pneg %p116
        $region42: #{tpu_custom_call.1} parent=31 // pred_check_branch
          %367 = sbr.rel (%p365) target = $region44
        $region43: #{tpu_custom_call.1} parent=31 // pred_region
          %s368 = smul.u32 2, %s31
          %p369 = scmp.lt.s32.totalorder %s30, 1
          %s370 = scalar_select %p369, %s30, 1
          %p371 = scmp.lt.s32.totalorder %s368, 1
          %s372 = scalar_select %p371, %s368, 1
          %s373 = smul.addr %s370, 2
          %s374 = sadd.s32 %s372, %s373
          %s375 = smul.addr %s374, 4
          %s376 = scalar_lea.vmem %s2, %s375
          %s377 = smul.u32 2, %s31
        $region44: #{tpu_custom_call.1} parent=31 // pred_fallthru
          _
        // Predicated region
        $region45: #{tpu_custom_call.1} parent=31 // pred_check
          %p378 = pneg %p142
        $region46: #{tpu_custom_call.1} parent=31 // pred_check_branch
          %380 = sbr.rel (%p378) target = $region48
        $region47: #{tpu_custom_call.1} parent=31 // pred_region
          %p381 = scmp.lt.s32.totalorder %s30, 1
          %s382 = scalar_select %p381, %s30, 1
          %s383 = scalar_lea.vmem %s3, %s382
        $region48: #{tpu_custom_call.1} parent=31 // pred_fallthru
          _
        // Predicated region
        $region49: #{tpu_custom_call.1} parent=31 // pred_check
          %p384 = pneg %p170
        $region50: #{tpu_custom_call.1} parent=31 // pred_check_branch
          %386 = sbr.rel (%p384) target = $region52
        $region51: #{tpu_custom_call.1} parent=31 // pred_region
          %s387 = smul.u32 2, %s31
          %p388 = scmp.lt.s32.totalorder %s30, 1
          %s389 = scalar_select %p388, %s30, 1
          %p390 = scmp.lt.s32.totalorder %s387, 1
          %s391 = scalar_select %p390, %s387, 1
          %s392 = smul.addr %s389, 2
          %s393 = sadd.s32 %s391, %s392
          %s394 = smul.addr %s393, 8
          %s395 = scalar_lea.vmem %s4, %s394
          %s396 = smul.u32 2, %s31
        $region52: #{tpu_custom_call.1} parent=31 // pred_fallthru
          _
      $region32: #{tpu_custom_call.1} parent=5 // pred_fallthru
        _
      %p397 = scmp.le.s32.totalorder 1, %s23
      %p398 = scmp.lt.s32.totalorder %s23, 9
      %p399 = pnand %p397, %p398
      %p400 = pneg %p399
      // Predicated region
      $region53: #{tpu_custom_call.1} parent=5 // pred_check
        _
      $region54: #{tpu_custom_call.1} parent=5 // pred_check_branch
        %402 = sbr.rel (%p399) target = $region56
      $region55: #{tpu_custom_call.1} parent=5 // pred_region
        %s403 = ssub.s32 %s23, 1
        %p404 = scmp.lt.s32.totalorder %s33, 1
        %s405 = scalar_select %p404, %s33, 1
        %s406 = smul.addr %s405, 16
        %s407 = smul.addr %s406, 4
        %s408 = scalar_lea.vmem %s0, %s407
        %p409 = pneg %p68
        %p410 = pneg %p65
        %p411 = scmp.lt.s32.totalorder %s33, 1
        %s412 = scalar_select %p411, %s33, 1
        %s413 = smul.addr %s412, 16
        %s414 = smul.addr %s413, 4
        %s415 = scalar_lea.vmem %s1, %s414
        %p416 = pneg %p94
        %p417 = pneg %p91
        %s418 = smul.u32 2, %s34
        %p419 = scmp.lt.s32.totalorder %s33, 1
        %s420 = scalar_select %p419, %s33, 1
        %p421 = scmp.lt.s32.totalorder %s418, 1
        %s422 = scalar_select %p421, %s418, 1
        %s423 = smul.addr %s420, 2
        %s424 = sadd.s32 %s422, %s423
        %s425 = smul.addr %s424, 4
        %s426 = scalar_lea.vmem %s2, %s425
        %p427 = pneg %p122
        %p428 = pneg %p119
        %p429 = scmp.lt.s32.totalorder %s33, 1
        %s430 = scalar_select %p429, %s33, 1
        %s431 = scalar_lea.vmem %s3, %s430
        %p432 = pneg %p148
        %p433 = pneg %p145
        %s434 = smul.u32 2, %s34
        %p435 = scmp.lt.s32.totalorder %s33, 1
        %s436 = scalar_select %p435, %s33, 1
        %p437 = scmp.lt.s32.totalorder %s434, 1
        %s438 = scalar_select %p437, %s434, 1
        %s439 = smul.addr %s436, 2
        %s440 = sadd.s32 %s438, %s439
        %s441 = smul.addr %s440, 8
        %s442 = scalar_lea.vmem %s4, %s441
        %p443 = pneg %p176
        %p444 = pneg %p173
        %p445 = pneg %p197
        %p446 = pneg %p194
        %p447 = pneg %p218
        %p448 = pneg %p215
        %p449 = pneg %p239
        %p450 = pneg %p236
        %p451 = pneg %p260
        %p452 = pneg %p257
        %p453 = pneg %p288
        %p454 = pneg %p285
        %s455 = sand.u32 %s275, 1
        %s456 = scalar_lea.sflag [#allocation3], %s455
        %s457 = sand.u32 %s275, 1
        %s458 = smul.addr %s457, 16
        %s459 = scalar_lea.vmem [#allocation2], %s458
        %p460 = pneg %p318
        %p461 = pneg %p315
        %s462 = sand.u32 %s305, 1
        %s463 = scalar_lea.sflag [#allocation5], %s462
        %s464 = sand.u32 %s305, 1
        %s465 = smul.addr %s464, 8
        %s466 = scalar_lea.vmem [#allocation4], %s465
        %p467 = scmp.lt.s32.totalorder %s33, 1
        %s468 = scalar_select %p467, %s33, 1
        %s469 = smul.addr %s468, 16
        %s470 = smul.addr %s469, 4
        %s471 = scalar_lea.vmem %s0, %s470
        %p472 = scmp.lt.s32.totalorder %s33, 1
        %s473 = scalar_select %p472, %s33, 1
        %s474 = smul.addr %s473, 16
        %s475 = smul.addr %s474, 4
        %s476 = scalar_lea.vmem %s1, %s475
        %s477 = smul.u32 2, %s34
        %p478 = scmp.lt.s32.totalorder %s33, 1
        %s479 = scalar_select %p478, %s33, 1
        %p480 = scmp.lt.s32.totalorder %s477, 1
        %s481 = scalar_select %p480, %s477, 1
        %s482 = smul.addr %s479, 2
        %s483 = sadd.s32 %s481, %s482
        %s484 = smul.addr %s483, 4
        %s485 = scalar_lea.vmem %s2, %s484
        %s486 = smul.u32 2, %s34
        %p487 = scmp.lt.s32.totalorder %s33, 1
        %s488 = scalar_select %p487, %s33, 1
        %s489 = scalar_lea.vmem %s3, %s488
        %s490 = smul.u32 2, %s34
        %p491 = scmp.lt.s32.totalorder %s33, 1
        %s492 = scalar_select %p491, %s33, 1
        %p493 = scmp.lt.s32.totalorder %s490, 1
        %s494 = scalar_select %p493, %s490, 1
        %s495 = smul.addr %s492, 2
        %s496 = sadd.s32 %s494, %s495
        %s497 = smul.addr %s496, 8
        %s498 = scalar_lea.vmem %s4, %s497
        %s499 = smul.u32 2, %s34
        %s500 = smul.u32 2, %s34
        %s501 = smul.u32 2, %s34
        %v503 = vld [vmem:[%s471] sm:$0xf]
        %v504 = vld [vmem:[%s471 + $0x4] sm:$0xf]
        %v505 = vld [vmem:[%s471 + $0x8] sm:$0xf]
        %v506 = vld [vmem:[%s471 + $0xc] sm:$0xf]
        %v507 = vld [vmem:[%s471 + $0x10] sm:$0xf]
        %v508 = vld [vmem:[%s471 + $0x14] sm:$0xf]
        %v509 = vld [vmem:[%s471 + $0x18] sm:$0xf]
        %v510 = vld [vmem:[%s471 + $0x1c] sm:$0xf]
        %v511 = vld [vmem:[%s471 + $0x20] sm:$0xf]
        %v512 = vld [vmem:[%s471 + $0x24] sm:$0xf]
        %v513 = vld [vmem:[%s471 + $0x28] sm:$0xf]
        %v514 = vld [vmem:[%s471 + $0x2c] sm:$0xf]
        %v515 = vld [vmem:[%s471 + $0x30] sm:$0xf]
        %v516 = vld [vmem:[%s471 + $0x34] sm:$0xf]
        %v517 = vld [vmem:[%s471 + $0x38] sm:$0xf]
        %v518 = vld [vmem:[%s471 + $0x3c] sm:$0xf]
        %v519 = vld [vmem:[%s476] sm:$0xf]
        %v520 = vld [vmem:[%s476 + $0x4] sm:$0xf]
        %v521 = vld [vmem:[%s476 + $0x8] sm:$0xf]
        %v522 = vld [vmem:[%s476 + $0xc] sm:$0xf]
        %v523 = vld [vmem:[%s476 + $0x10] sm:$0xf]
        %v524 = vld [vmem:[%s476 + $0x14] sm:$0xf]
        %v525 = vld [vmem:[%s476 + $0x18] sm:$0xf]
        %v526 = vld [vmem:[%s476 + $0x1c] sm:$0xf]
        %v527 = vld [vmem:[%s476 + $0x20] sm:$0xf]
        %v528 = vld [vmem:[%s476 + $0x24] sm:$0xf]
        %v529 = vld [vmem:[%s476 + $0x28] sm:$0xf]
        %v530 = vld [vmem:[%s476 + $0x2c] sm:$0xf]
        %v531 = vld [vmem:[%s476 + $0x30] sm:$0xf]
        %v532 = vld [vmem:[%s476 + $0x34] sm:$0xf]
        %v533 = vld [vmem:[%s476 + $0x38] sm:$0xf]
        %v534 = vld [vmem:[%s476 + $0x3c] sm:$0xf]
        %v535 = vld [vmem:[%s485] sm:$0xf]
        %v536 = vld [vmem:[%s485 + $0x4] sm:$0xf]
        %v537 = vld [vmem:[%s489] sm:$0x1]
        %v538 = vld [vmem:[%s498] sm:$0xff]
        %v539 = vld [vmem:[%s498 + $0x8] sm:$0xff]
        %s540 = smul.u32 %s35, 2
        %s541 = smul.addr %s540, 4
        %s542 = scalar_lea.vmem %s5, %s541
        %v543 = vld [vmem:[%s542] sm:$0xf]
        %v544 = vld [vmem:[%s542 + $0x4] sm:$0xf]
        %s545 = smul.addr %s540, 4
        %s546 = scalar_lea.vmem %s6, %s545
        %v547 = vld [vmem:[%s546] sm:$0xf]
        %v548 = vld [vmem:[%s546 + $0x4] sm:$0xf]
        %s549 = smul.addr %s540, 4
        %s550 = scalar_lea.vmem %s7, %s549
        %v551 = vld [vmem:[%s550] sm:$0xf]
        %v552 = vld [vmem:[%s550 + $0x4] sm:$0xf]
        %s553 = smul.addr %s35, 4
        %s554 = scalar_lea.vmem %s8, %s553
        %v555 = vld [vmem:[%s554] sm:$0xf]
        %v572 = vunpack.c.l.b16 %v503
        %v573 = vunpack.c.l.b16 %v504
        %v574 = vunpack.c.l.b16 %v505
        %v575 = vunpack.c.l.b16 %v506
        %v576 = vunpack.c.l.b16 %v507
        %v577 = vunpack.c.l.b16 %v508
        %v578 = vunpack.c.l.b16 %v509
        %v579 = vunpack.c.l.b16 %v510
        %v580 = vunpack.c.l.b16 %v511
        %v581 = vunpack.c.l.b16 %v512
        %v582 = vunpack.c.l.b16 %v513
        %v583 = vunpack.c.l.b16 %v514
        %v584 = vunpack.c.l.b16 %v515
        %v585 = vunpack.c.l.b16 %v516
        %v586 = vunpack.c.l.b16 %v517
        %v587 = vunpack.c.l.b16 %v518
        %v588 = vpack.c.b16 %v573, %v572
        %v589 = vpack.c.b16 %v575, %v574
        %v590 = vpack.c.b16 %v577, %v576
        %v591 = vpack.c.b16 %v579, %v578
        %v592 = vpack.c.b16 %v581, %v580
        %v593 = vpack.c.b16 %v583, %v582
        %v594 = vpack.c.b16 %v585, %v584
        %v595 = vpack.c.b16 %v587, %v586
        %v598 = vunpack.c.l.b16 %v543
        %v599 = vunpack.c.l.b16 %v544
        %v600 = vpack.c.b16 %v599, %v598
        %vm602 = vcmask 130048
        %v604 = vsel %vm602, %v588, 0
        %v607 = vsel %vm602, %v589, 0
        %v610 = vsel %vm602, %v590, 0
        %v613 = vsel %vm602, %v591, 0
        %v616 = vsel %vm602, %v592, 0
        %v619 = vsel %vm602, %v593, 0
        %v622 = vsel %vm602, %v594, 0
        %v625 = vsel %vm602, %v595, 0
        %627 = vmatprep.subr.bf16.mxu0 0
        %628 = vmatpush1.bf16.msra.mxu0 0
        %629 = vmatprep.subr.bf16.mxu0 0
        %630 = vmatpush1.bf16.msra.mxu0 0
        %631 = vmatprep.subr.bf16.mxu0 0
        %632 = vmatpush1.bf16.msra.mxu0 0
        %633 = vmatprep.subr.bf16.mxu0 0
        %634 = vmatpush1.bf16.msra.mxu0 0
        %635 = vmatprep.subr.bf16.mxu0 0
        %636 = vmatpush1.bf16.msra.mxu0 0
        %637 = vmatprep.subr.bf16.mxu0 0
        %638 = vmatpush1.bf16.msra.mxu0 0
        %639 = vmatprep.subr.bf16.mxu0 0
        %640 = vmatpush1.bf16.msra.mxu0 0
        %641 = vmatprep.subr.bf16.mxu0 0
        %642 = vmatpush1.bf16.msra.mxu0 %v600
        %643 = vmatprep.subr.bf16.mxu0 0
        %644 = vmatpush2.bf16.msra.mxu0 0
        %645 = vmatprep.subr.bf16.mxu0 0
        %646 = vmatpush2.bf16.msra.mxu0 0
        %647 = vmatprep.subr.bf16.mxu0 0
        %648 = vmatpush2.bf16.msra.mxu0 0
        %649 = vmatprep.subr.bf16.mxu0 0
        %650 = vmatpush2.bf16.msra.mxu0 0
        %651 = vmatprep.subr.bf16.mxu0 0
        %652 = vmatpush2.bf16.msra.mxu0 0
        %653 = vmatprep.subr.bf16.mxu0 0
        %654 = vmatpush2.bf16.msra.mxu0 0
        %655 = vmatprep.subr.bf16.mxu0 0
        %656 = vmatpush2.bf16.msra.mxu0 0
        %657 = vmatprep.subr.bf16.mxu0 0
        %658 = vmatpush2.bf16.msra.mxu0 0
        %659 = vmatprep.mubr.bf16.mxu0 0
        %660 = vmatmul.mubr.bf16.gmra.mxu0 %v604
        %v661 = vpop.f32.mrf.mxu0
        %v662 = vadd.f32 0.0, %v661
        %v663 = vpop.f32.mrf.mxu0
        %v664 = vpop.f32.mrf.mxu0
        %v665 = vadd.f32 0.0, %v664
        %v666 = vpop.f32.mrf.mxu0
        %667 = vmatprep.mubr.bf16.mxu0 0
        %668 = vmatmul.mubr.bf16.gmra.mxu0 %v607
        %v669 = vpop.f32.mrf.mxu0
        %v670 = vadd.f32 0.0, %v669
        %v671 = vpop.f32.mrf.mxu0
        %v672 = vpop.f32.mrf.mxu0
        %v673 = vadd.f32 0.0, %v672
        %v674 = vpop.f32.mrf.mxu0
        %675 = vmatprep.mubr.bf16.mxu0 0
        %676 = vmatmul.mubr.bf16.gmra.mxu0 %v610
        %v677 = vpop.f32.mrf.mxu0
        %v678 = vadd.f32 0.0, %v677
        %v679 = vpop.f32.mrf.mxu0
        %v680 = vpop.f32.mrf.mxu0
        %v681 = vadd.f32 0.0, %v680
        %v682 = vpop.f32.mrf.mxu0
        %683 = vmatprep.mubr.bf16.mxu0 0
        %684 = vmatmul.mubr.bf16.gmra.mxu0 %v613
        %v685 = vpop.f32.mrf.mxu0
        %v686 = vadd.f32 0.0, %v685
        %v687 = vpop.f32.mrf.mxu0
        %v688 = vpop.f32.mrf.mxu0
        %v689 = vadd.f32 0.0, %v688
        %v690 = vpop.f32.mrf.mxu0
        %691 = vmatprep.mubr.bf16.mxu0 0
        %692 = vmatmul.mubr.bf16.gmra.mxu0 %v616
        %v693 = vpop.f32.mrf.mxu0
        %v694 = vadd.f32 0.0, %v693
        %v695 = vpop.f32.mrf.mxu0
        %v696 = vpop.f32.mrf.mxu0
        %v697 = vadd.f32 0.0, %v696
        %v698 = vpop.f32.mrf.mxu0
        %699 = vmatprep.mubr.bf16.mxu0 0
        %700 = vmatmul.mubr.bf16.gmra.mxu0 %v619
        %v701 = vpop.f32.mrf.mxu0
        %v702 = vadd.f32 0.0, %v701
        %v703 = vpop.f32.mrf.mxu0
        %v704 = vpop.f32.mrf.mxu0
        %v705 = vadd.f32 0.0, %v704
        %v706 = vpop.f32.mrf.mxu0
        %707 = vmatprep.mubr.bf16.mxu0 0
        %708 = vmatmul.mubr.bf16.gmra.mxu0 %v622
        %v709 = vpop.f32.mrf.mxu0
        %v710 = vadd.f32 0.0, %v709
        %v711 = vpop.f32.mrf.mxu0
        %v712 = vpop.f32.mrf.mxu0
        %v713 = vadd.f32 0.0, %v712
        %v714 = vpop.f32.mrf.mxu0
        %715 = vmatprep.mubr.bf16.mxu0 0
        %716 = vmatmul.mubr.bf16.gmra.mxu0 %v625
        %v717 = vpop.f32.mrf.mxu0
        %v718 = vadd.f32 0.0, %v717
        %v719 = vpop.f32.mrf.mxu0
        %v720 = vpop.f32.mrf.mxu0
        %v721 = vadd.f32 0.0, %v720
        %v722 = vpop.f32.mrf.mxu0
        %723 = vdwg.mxu0
        %v740 = vunpack.c.l.b16 %v519
        %v741 = vunpack.c.l.b16 %v520
        %v742 = vunpack.c.l.b16 %v521
        %v743 = vunpack.c.l.b16 %v522
        %v744 = vunpack.c.l.b16 %v523
        %v745 = vunpack.c.l.b16 %v524
        %v746 = vunpack.c.l.b16 %v525
        %v747 = vunpack.c.l.b16 %v526
        %v748 = vunpack.c.l.b16 %v527
        %v749 = vunpack.c.l.b16 %v528
        %v750 = vunpack.c.l.b16 %v529
        %v751 = vunpack.c.l.b16 %v530
        %v752 = vunpack.c.l.b16 %v531
        %v753 = vunpack.c.l.b16 %v532
        %v754 = vunpack.c.l.b16 %v533
        %v755 = vunpack.c.l.b16 %v534
        %v756 = vpack.c.b16 %v741, %v740
        %v757 = vpack.c.b16 %v743, %v742
        %v758 = vpack.c.b16 %v745, %v744
        %v759 = vpack.c.b16 %v747, %v746
        %v760 = vpack.c.b16 %v749, %v748
        %v761 = vpack.c.b16 %v751, %v750
        %v762 = vpack.c.b16 %v753, %v752
        %v763 = vpack.c.b16 %v755, %v754
        %v766 = vunpack.c.l.b16 %v547
        %v767 = vunpack.c.l.b16 %v548
        %v768 = vpack.c.b16 %v767, %v766
        %v771 = vsel %vm602, %v756, 0
        %v774 = vsel %vm602, %v757, 0
        %v777 = vsel %vm602, %v758, 0
        %v780 = vsel %vm602, %v759, 0
        %v783 = vsel %vm602, %v760, 0
        %v786 = vsel %vm602, %v761, 0
        %v789 = vsel %vm602, %v762, 0
        %v792 = vsel %vm602, %v763, 0
        %794 = vmatprep.subr.bf16.mxu0 0
        %795 = vmatpush1.bf16.msra.mxu0 0
        %796 = vmatprep.subr.bf16.mxu0 0
        %797 = vmatpush1.bf16.msra.mxu0 0
        %798 = vmatprep.subr.bf16.mxu0 0
        %799 = vmatpush1.bf16.msra.mxu0 0
        %800 = vmatprep.subr.bf16.mxu0 0
        %801 = vmatpush1.bf16.msra.mxu0 0
        %802 = vmatprep.subr.bf16.mxu0 0
        %803 = vmatpush1.bf16.msra.mxu0 0
        %804 = vmatprep.subr.bf16.mxu0 0
        %805 = vmatpush1.bf16.msra.mxu0 0
        %806 = vmatprep.subr.bf16.mxu0 0
        %807 = vmatpush1.bf16.msra.mxu0 0
        %808 = vmatprep.subr.bf16.mxu0 0
        %809 = vmatpush1.bf16.msra.mxu0 %v768
        %810 = vmatprep.subr.bf16.mxu0 0
        %811 = vmatpush2.bf16.msra.mxu0 0
        %812 = vmatprep.subr.bf16.mxu0 0
        %813 = vmatpush2.bf16.msra.mxu0 0
        %814 = vmatprep.subr.bf16.mxu0 0
        %815 = vmatpush2.bf16.msra.mxu0 0
        %816 = vmatprep.subr.bf16.mxu0 0
        %817 = vmatpush2.bf16.msra.mxu0 0
        %818 = vmatprep.subr.bf16.mxu0 0
        %819 = vmatpush2.bf16.msra.mxu0 0
        %820 = vmatprep.subr.bf16.mxu0 0
        %821 = vmatpush2.bf16.msra.mxu0 0
        %822 = vmatprep.subr.bf16.mxu0 0
        %823 = vmatpush2.bf16.msra.mxu0 0
        %824 = vmatprep.subr.bf16.mxu0 0
        %825 = vmatpush2.bf16.msra.mxu0 0
        %826 = vmatprep.mubr.bf16.mxu0 0
        %827 = vmatmul.mubr.bf16.gmra.mxu0 %v771
        %v828 = vpop.f32.mrf.mxu0
        %v829 = vadd.f32 0.0, %v828
        %v830 = vpop.f32.mrf.mxu0
        %v831 = vpop.f32.mrf.mxu0
        %v832 = vadd.f32 0.0, %v831
        %v833 = vpop.f32.mrf.mxu0
        %834 = vmatprep.mubr.bf16.mxu0 0
        %835 = vmatmul.mubr.bf16.gmra.mxu0 %v774
        %v836 = vpop.f32.mrf.mxu0
        %v837 = vadd.f32 0.0, %v836
        %v838 = vpop.f32.mrf.mxu0
        %v839 = vpop.f32.mrf.mxu0
        %v840 = vadd.f32 0.0, %v839
        %v841 = vpop.f32.mrf.mxu0
        %842 = vmatprep.mubr.bf16.mxu0 0
        %843 = vmatmul.mubr.bf16.gmra.mxu0 %v777
        %v844 = vpop.f32.mrf.mxu0
        %v845 = vadd.f32 0.0, %v844
        %v846 = vpop.f32.mrf.mxu0
        %v847 = vpop.f32.mrf.mxu0
        %v848 = vadd.f32 0.0, %v847
        %v849 = vpop.f32.mrf.mxu0
        %850 = vmatprep.mubr.bf16.mxu0 0
        %851 = vmatmul.mubr.bf16.gmra.mxu0 %v780
        %v852 = vpop.f32.mrf.mxu0
        %v853 = vadd.f32 0.0, %v852
        %v854 = vpop.f32.mrf.mxu0
        %v855 = vpop.f32.mrf.mxu0
        %v856 = vadd.f32 0.0, %v855
        %v857 = vpop.f32.mrf.mxu0
        %858 = vmatprep.mubr.bf16.mxu0 0
        %859 = vmatmul.mubr.bf16.gmra.mxu0 %v783
        %v860 = vpop.f32.mrf.mxu0
        %v861 = vadd.f32 0.0, %v860
        %v862 = vpop.f32.mrf.mxu0
        %v863 = vpop.f32.mrf.mxu0
        %v864 = vadd.f32 0.0, %v863
        %v865 = vpop.f32.mrf.mxu0
        %866 = vmatprep.mubr.bf16.mxu0 0
        %867 = vmatmul.mubr.bf16.gmra.mxu0 %v786
        %v868 = vpop.f32.mrf.mxu0
        %v869 = vadd.f32 0.0, %v868
        %v870 = vpop.f32.mrf.mxu0
        %v871 = vpop.f32.mrf.mxu0
        %v872 = vadd.f32 0.0, %v871
        %v873 = vpop.f32.mrf.mxu0
        %874 = vmatprep.mubr.bf16.mxu0 0
        %875 = vmatmul.mubr.bf16.gmra.mxu0 %v789
        %v876 = vpop.f32.mrf.mxu0
        %v877 = vadd.f32 0.0, %v876
        %v878 = vpop.f32.mrf.mxu0
        %v879 = vpop.f32.mrf.mxu0
        %v880 = vadd.f32 0.0, %v879
        %v881 = vpop.f32.mrf.mxu0
        %882 = vmatprep.mubr.bf16.mxu0 0
        %883 = vmatmul.mubr.bf16.gmra.mxu0 %v792
        %v884 = vpop.f32.mrf.mxu0
        %v885 = vadd.f32 0.0, %v884
        %v886 = vpop.f32.mrf.mxu0
        %v887 = vpop.f32.mrf.mxu0
        %v888 = vadd.f32 0.0, %v887
        %v889 = vpop.f32.mrf.mxu0
        %890 = vdwg.mxu0
        %v893 = vunpack.c.l.b16 %v535
        %v894 = vunpack.c.l.b16 %v536
        %v895 = vpack.c.b16 %v894, %v893
        %v898 = vunpack.c.l.b16 %v551
        %v899 = vunpack.c.l.b16 %v552
        %v900 = vpack.c.b16 %v899, %v898
        %v903 = vsel %vm602, %v895, 0
        %905 = vmatprep.subr.bf16.mxu0 0
        %906 = vmatpush1.bf16.msra.mxu0 0
        %907 = vmatprep.subr.bf16.mxu0 0
        %908 = vmatpush1.bf16.msra.mxu0 0
        %909 = vmatprep.subr.bf16.mxu0 0
        %910 = vmatpush1.bf16.msra.mxu0 0
        %911 = vmatprep.subr.bf16.mxu0 0
        %912 = vmatpush1.bf16.msra.mxu0 0
        %913 = vmatprep.subr.bf16.mxu0 0
        %914 = vmatpush1.bf16.msra.mxu0 0
        %915 = vmatprep.subr.bf16.mxu0 0
        %916 = vmatpush1.bf16.msra.mxu0 0
        %917 = vmatprep.subr.bf16.mxu0 0
        %918 = vmatpush1.bf16.msra.mxu0 0
        %919 = vmatprep.subr.bf16.mxu0 0
        %920 = vmatpush1.bf16.msra.mxu0 %v900
        %921 = vmatprep.subr.bf16.mxu0 0
        %922 = vmatpush2.bf16.msra.mxu0 0
        %923 = vmatprep.subr.bf16.mxu0 0
        %924 = vmatpush2.bf16.msra.mxu0 0
        %925 = vmatprep.subr.bf16.mxu0 0
        %926 = vmatpush2.bf16.msra.mxu0 0
        %927 = vmatprep.subr.bf16.mxu0 0
        %928 = vmatpush2.bf16.msra.mxu0 0
        %929 = vmatprep.subr.bf16.mxu0 0
        %930 = vmatpush2.bf16.msra.mxu0 0
        %931 = vmatprep.subr.bf16.mxu0 0
        %932 = vmatpush2.bf16.msra.mxu0 0
        %933 = vmatprep.subr.bf16.mxu0 0
        %934 = vmatpush2.bf16.msra.mxu0 0
        %935 = vmatprep.subr.bf16.mxu0 0
        %936 = vmatpush2.bf16.msra.mxu0 0
        %937 = vmatprep.mubr.bf16.mxu0 0
        %938 = vmatmul.mubr.bf16.gmra.mxu0 %v903
        %v939 = vpop.f32.mrf.mxu0
        %v940 = vadd.f32 0.0, %v939
        %v941 = vpop.f32.mrf.mxu0
        %v942 = vpop.f32.mrf.mxu0
        %v943 = vadd.f32 0.0, %v942
        %v944 = vpop.f32.mrf.mxu0
        %945 = vdwg.mxu0
        %v946 = vpack.c.bf16 %v943, %v940
        %v947 = vpack.c.bf16 %v665, %v662
        %v948 = vpack.c.bf16 %v673, %v670
        %v949 = vpack.c.bf16 %v681, %v678
        %v950 = vpack.c.bf16 %v689, %v686
        %v951 = vpack.c.bf16 %v697, %v694
        %v952 = vpack.c.bf16 %v705, %v702
        %v953 = vpack.c.bf16 %v713, %v710
        %v954 = vpack.c.bf16 %v721, %v718
        %v956 = vlaneseq
        %v957 = vshrl.u32 %v956, 7
        %v958 = vsub.s32 0, %v957
        %v959 = vrot.slane %v537, %v958
        %vm961 = vcmask 64512
        %v963 = vsel %vm961, %v946, 0
        %v966 = vsel %vm961, %v947, 0
        %v969 = vsel %vm961, %v948, 0
        %v972 = vsel %vm961, %v949, 0
        %v975 = vsel %vm961, %v950, 0
        %v978 = vsel %vm961, %v951, 0
        %v981 = vsel %vm961, %v952, 0
        %v984 = vsel %vm961, %v953, 0
        %v987 = vsel %vm961, %v954, 0
        %989 = vmatprep.subr.bf16.mxu0 0
        %990 = vmatpush1.bf16.xpose.msra.mxu0 %v987
        %991 = vmatprep.subr.bf16.mxu0 0
        %992 = vmatpush1.bf16.xpose.msra.mxu0 %v984
        %993 = vmatprep.subr.bf16.mxu0 0
        %994 = vmatpush1.bf16.xpose.msra.mxu0 %v981
        %995 = vmatprep.subr.bf16.mxu0 0
        %996 = vmatpush1.bf16.xpose.msra.mxu0 %v978
        %997 = vmatprep.subr.bf16.mxu0 0
        %998 = vmatpush1.bf16.xpose.msra.mxu0 %v975
        %999 = vmatprep.subr.bf16.mxu0 0
        %1000 = vmatpush1.bf16.xpose.msra.mxu0 %v972
        %1001 = vmatprep.subr.bf16.mxu0 0
        %1002 = vmatpush1.bf16.xpose.msra.mxu0 %v969
        %1003 = vmatprep.subr.bf16.mxu0 0
        %1004 = vmatpush1.bf16.xpose.msra.mxu0 %v966
        %1005 = vmatprep.subr.bf16.mxu0 0
        %1006 = vmatpush2.bf16.xpose.msra.mxu0 0
        %1007 = vmatprep.subr.bf16.mxu0 0
        %1008 = vmatpush2.bf16.xpose.msra.mxu0 0
        %1009 = vmatprep.subr.bf16.mxu0 0
        %1010 = vmatpush2.bf16.xpose.msra.mxu0 0
        %1011 = vmatprep.subr.bf16.mxu0 0
        %1012 = vmatpush2.bf16.xpose.msra.mxu0 0
        %1013 = vmatprep.subr.bf16.mxu0 0
        %1014 = vmatpush2.bf16.xpose.msra.mxu0 0
        %1015 = vmatprep.subr.bf16.mxu0 0
        %1016 = vmatpush2.bf16.xpose.msra.mxu0 0
        %1017 = vmatprep.subr.bf16.mxu0 0
        %1018 = vmatpush2.bf16.xpose.msra.mxu0 0
        %1019 = vmatprep.subr.bf16.mxu0 0
        %1020 = vmatpush2.bf16.xpose.msra.mxu0 0
        %1021 = vmatprep.mubr.bf16.mxu0 0
        %1022 = vmatmul.mubr.bf16.gmra.mxu0 %v963
        %v1023 = vpop.f32.mrf.mxu0
        %v1024 = vadd.f32 %v959, %v1023
        %v1025 = vpop.f32.mrf.mxu0
        %v1026 = vpop.f32.mrf.mxu0
        %v1027 = vadd.f32 %v959, %v1026
        %v1028 = vpop.f32.mrf.mxu0
        %1029 = vdwg.mxu0
        %1030 = vmax.xlane.f32.xlu0 %v1024
        %v1031 = vpop.xlane.xlu0 %1030
        %1032 = vmax.xlane.f32.xlu0 %v1027
        %v1033 = vpop.xlane.xlu0 %1032
        %v1034 = vsub.f32 %v1024, %v1031
        %v1035 = vsub.f32 %v1027, %v1033
        %v1036 = vmul.f32 %v1034, 1.442695
        %v1037 = vpow.pop %v1036
        %v1038 = vmul.f32 %v1035, 1.442695
        %v1039 = vpow.pop %v1038
        %1040 = vadd.xlane.f32.xlu0 %v1037
        %v1041 = vpop.xlane.xlu0 %1040
        %1042 = vadd.xlane.f32.xlu0 %v1039
        %v1043 = vpop.xlane.xlu0 %1042
        %v1044 = vrcp.pop %v1041
        %v1045 = vrcp.pop %v1043
        %v1046 = vmul.f32 %v1037, %v1044
        %v1047 = vmul.f32 %v1039, %v1045
        %1049 = vset.pattern.permute.xlu0 0
        %1050 = vperm.xlu0 %1049, %v538
        %v1051 = vpop.permute.xlu0 %1050
        %1054 = vset.pattern.permute.xlu0 0
        %1055 = vperm.xlu0 %1054, %v539
        %v1056 = vpop.permute.xlu0 %1055
        %v1058 = vmul.f32 %v1046, %v1051
        %v1059 = vmul.f32 %v1047, %v1056
        %v1060 = vpack.c.bf16 %v1059, %v1058
        %v1062 = vunpack.c.l.b16 %v1060
        %v1063 = vunpack.c.h.b16 %v1060
        %v1064 = vpack.c.b16 %v1062, %v1062
        %v1065 = vpack.c.b16 %v1063, %v1063
        %1068 = vst [vmem:[%s466] sm:$0xf] %v1064
        %1069 = vst [vmem:[%s466 + $0x4] sm:$0xf] %v1065
        %v1070 = vpack.c.bf16 %v832, %v829
        %v1071 = vpack.c.bf16 %v840, %v837
        %v1072 = vpack.c.bf16 %v848, %v845
        %v1073 = vpack.c.bf16 %v856, %v853
        %v1074 = vpack.c.bf16 %v864, %v861
        %v1075 = vpack.c.bf16 %v872, %v869
        %v1076 = vpack.c.bf16 %v880, %v877
        %v1077 = vpack.c.bf16 %v888, %v885
        %1078 = vmatprep.subr.bf16.mxu0 0
        %1079 = vmatpush1.bf16.msra.mxu0 %v1077
        %1080 = vmatprep.subr.bf16.mxu0 0
        %1081 = vmatpush1.bf16.msra.mxu0 %v1076
        %1082 = vmatprep.subr.bf16.mxu0 0
        %1083 = vmatpush1.bf16.msra.mxu0 %v1075
        %1084 = vmatprep.subr.bf16.mxu0 0
        %1085 = vmatpush1.bf16.msra.mxu0 %v1074
        %1086 = vmatprep.subr.bf16.mxu0 0
        %1087 = vmatpush1.bf16.msra.mxu0 %v1073
        %1088 = vmatprep.subr.bf16.mxu0 0
        %1089 = vmatpush1.bf16.msra.mxu0 %v1072
        %1090 = vmatprep.subr.bf16.mxu0 0
        %1091 = vmatpush1.bf16.msra.mxu0 %v1071
        %1092 = vmatprep.subr.bf16.mxu0 0
        %1093 = vmatpush1.bf16.msra.mxu0 %v1070
        %1094 = vmatprep.subr.bf16.mxu0 0
        %1095 = vmatpush2.bf16.msra.mxu0 0
        %1096 = vmatprep.subr.bf16.mxu0 0
        %1097 = vmatpush2.bf16.msra.mxu0 0
        %1098 = vmatprep.subr.bf16.mxu0 0
        %1099 = vmatpush2.bf16.msra.mxu0 0
        %1100 = vmatprep.subr.bf16.mxu0 0
        %1101 = vmatpush2.bf16.msra.mxu0 0
        %1102 = vmatprep.subr.bf16.mxu0 0
        %1103 = vmatpush2.bf16.msra.mxu0 0
        %1104 = vmatprep.subr.bf16.mxu0 0
        %1105 = vmatpush2.bf16.msra.mxu0 0
        %1106 = vmatprep.subr.bf16.mxu0 0
        %1107 = vmatpush2.bf16.msra.mxu0 0
        %1108 = vmatprep.subr.bf16.mxu0 0
        %1109 = vmatpush2.bf16.msra.mxu0 0
        %1110 = vmatprep.mubr.bf16.mxu0 0
        %1111 = vmatmul.mubr.bf16.gmra.mxu0 %v1060
        %v1112 = vpop.f32.mrf.mxu0
        %v1113 = vadd.f32 0.0, %v1112
        %v1114 = vpop.f32.mrf.mxu0
        %v1115 = vpop.f32.mrf.mxu0
        %v1116 = vadd.f32 0.0, %v1115
        %v1117 = vpop.f32.mrf.mxu0
        %1118 = vdwg.mxu0
        %v1119 = vpack.c.bf16 %v1116, %v1113
        %v1121 = vsel %vm961, %v1119, 0
        %vm1123 = vcmask 1043456
        %v1125 = vsel %vm1123, %v555, 0
        %1127 = vmatprep.subr.bf16.mxu0 0
        %1128 = vmatpush1.bf16.msra.mxu0 0
        %1129 = vmatprep.subr.bf16.mxu0 0
        %1130 = vmatpush1.bf16.msra.mxu0 0
        %1131 = vmatprep.subr.bf16.mxu0 0
        %1132 = vmatpush1.bf16.msra.mxu0 0
        %1133 = vmatprep.subr.bf16.mxu0 0
        %1134 = vmatpush1.bf16.msra.mxu0 0
        %1135 = vmatprep.subr.bf16.mxu0 0
        %1136 = vmatpush1.bf16.msra.mxu0 0
        %1137 = vmatprep.subr.bf16.mxu0 0
        %1138 = vmatpush1.bf16.msra.mxu0 0
        %1139 = vmatprep.subr.bf16.mxu0 0
        %1140 = vmatpush1.bf16.msra.mxu0 0
        %1141 = vmatprep.subr.bf16.mxu0 0
        %1142 = vmatpush1.bf16.msra.mxu0 %v1125
        %1143 = vmatprep.subr.bf16.mxu0 0
        %1144 = vmatpush2.bf16.msra.mxu0 0
        %1145 = vmatprep.subr.bf16.mxu0 0
        %1146 = vmatpush2.bf16.msra.mxu0 0
        %1147 = vmatprep.subr.bf16.mxu0 0
        %1148 = vmatpush2.bf16.msra.mxu0 0
        %1149 = vmatprep.subr.bf16.mxu0 0
        %1150 = vmatpush2.bf16.msra.mxu0 0
        %1151 = vmatprep.subr.bf16.mxu0 0
        %1152 = vmatpush2.bf16.msra.mxu0 0
        %1153 = vmatprep.subr.bf16.mxu0 0
        %1154 = vmatpush2.bf16.msra.mxu0 0
        %1155 = vmatprep.subr.bf16.mxu0 0
        %1156 = vmatpush2.bf16.msra.mxu0 0
        %1157 = vmatprep.subr.bf16.mxu0 0
        %1158 = vmatpush2.bf16.msra.mxu0 0
        %1159 = vmatprep.mubr.bf16.mxu0 0
        %1160 = vmatmul.mubr.bf16.gmra.mxu0 %v1121
        %v1161 = vpop.f32.mrf.mxu0
        %v1162 = vadd.f32 0.0, %v1161
        %v1163 = vpop.f32.mrf.mxu0
        %v1164 = vpop.f32.mrf.mxu0
        %v1165 = vadd.f32 0.0, %v1164
        %v1166 = vpop.f32.mrf.mxu0
        %1167 = vdwg.mxu0
        %p1168 = scmp.eq.s32.totalorder %s35, 0
        // Predicated region
        $region57: #{tpu_custom_call.1} parent=55 // pred_check
          %p1169 = pneg %p1168
        $region58: #{tpu_custom_call.1} parent=55 // pred_check_branch
          %1171 = sbr.rel (%p1169) target = $region60
        $region59: #{tpu_custom_call.1} parent=55 // pred_region
          %1172 = vst [vmem:[%s459] sm:$0xff] %v1162
          %1173 = vst [vmem:[%s459 + $0x8] sm:$0xff] %v1165
        $region60: #{tpu_custom_call.1} parent=55 // pred_fallthru
          _
        %p1174 = scmp.gt.s32.totalorder %s35, 0
        // Predicated region
        $region61: #{tpu_custom_call.1} parent=55 // pred_check
          %p1175 = pneg %p1174
        $region62: #{tpu_custom_call.1} parent=55 // pred_check_branch
          %1177 = sbr.rel (%p1175) target = $region64
        $region63: #{tpu_custom_call.1} parent=55 // pred_region
          %v1178 = vld [vmem:[%s459] sm:$0xff]
          %v1179 = vld [vmem:[%s459 + $0x8] sm:$0xff]
          %v1180 = vadd.f32 %v1178, %v1162
          %v1181 = vadd.f32 %v1179, %v1165
          %1182 = vst [vmem:[%s459] sm:$0xff] %v1180
          %1183 = vst [vmem:[%s459 + $0x8] sm:$0xff] %v1181
        $region64: #{tpu_custom_call.1} parent=55 // pred_fallthru
          _
        %s1184 = sand.u32 %s275, 1
        %s1185 = scalar_lea.sflag [#allocation3], %s1184
        %s1186 = sand.u32 %s275, 1
        %s1187 = smul.addr %s1186, 16
        %s1188 = scalar_lea.vmem [#allocation2], %s1187
        %s1189 = sand.u32 %s305, 1
        %s1190 = scalar_lea.sflag [#allocation5], %s1189
        %s1191 = sand.u32 %s305, 1
        %s1192 = smul.addr %s1191, 8
        %s1193 = scalar_lea.vmem [#allocation4], %s1192
        // Predicated region
        $region65: #{tpu_custom_call.1} parent=55 // pred_check
          %p1194 = pneg %p285
        $region66: #{tpu_custom_call.1} parent=55 // pred_check_branch
          %1196 = sbr.rel (%p1194) target = $region68
        $region67: #{tpu_custom_call.1} parent=55 // pred_region
          %s1197 = smul.u32 2, %s34
          %s1199 = ssub.s32 256, 256
          %1200 = vsyncadd %s1185, %s1199
          %s1201 = smul.addr %s33, 2
          %s1202 = sadd.s32 %s1197, %s1201
          %s1203 = smul.addr %s1202, 128
          %s1204 = scalar_lea.hbm %s9, %s1203
          %s1205 = sshll.u32 %s1188, 4
          %s1206 = int_to_ptr.vmem [resolvable:$true] %s1205
          %1211 = dma.vmem_to_hbm [thread:$0]  %s1206, 256, %s1204, %s1185, 128, 128, 8
        $region68: #{tpu_custom_call.1} parent=55 // pred_fallthru
          _
        // Predicated region
        $region69: #{tpu_custom_call.1} parent=55 // pred_check
          %p1212 = pneg %p315
        $region70: #{tpu_custom_call.1} parent=55 // pred_check_branch
          %1214 = sbr.rel (%p1212) target = $region72
        $region71: #{tpu_custom_call.1} parent=55 // pred_region
          %s1215 = smul.u32 2, %s34
          %s1217 = ssub.s32 128, 128
          %1218 = vsyncadd %s1190, %s1217
          %s1219 = smul.addr %s35, 2
          %s1220 = sadd.s32 %s1215, %s1219
          %s1221 = smul.addr %s33, 8
          %s1222 = sadd.s32 %s1220, %s1221
          %s1223 = smul.addr %s1222, 64
          %s1224 = scalar_lea.hbm %s10, %s1223
          %s1225 = sshll.u32 %s1193, 4
          %s1226 = int_to_ptr.vmem [resolvable:$true] %s1225
          %1231 = dma.vmem_to_hbm [thread:$0]  %s1226, 128, %s1224, %s1190, 64, 64, 4
        $region72: #{tpu_custom_call.1} parent=55 // pred_fallthru
          _
      $region56: #{tpu_custom_call.1} parent=5 // pred_fallthru
        _
      %p1232 = scmp.le.s32.totalorder 2, %s23
      // Predicated region
      $region73: #{tpu_custom_call.1} parent=5 // pred_check
        %p1233 = pneg %p1232
      $region74: #{tpu_custom_call.1} parent=5 // pred_check_branch
        %1235 = sbr.rel (%p1233) target = $region76
      $region75: #{tpu_custom_call.1} parent=5 // pred_region
        %s1236 = ssub.s32 %s23, 2
        // Predicated region
        $region77: #{tpu_custom_call.1} parent=75 // pred_check
          %p1237 = pneg %p291
        $region78: #{tpu_custom_call.1} parent=75 // pred_check_branch
          %1239 = sbr.rel (%p1237) target = $region80
        $region79: #{tpu_custom_call.1} parent=75 // pred_region
          %s1240 = sand.u32 %s276, 1
          %s1241 = scalar_lea.sflag [#allocation3], %s1240
          %s1242 = sand.u32 %s276, 1
          %s1243 = smul.addr %s1242, 16
          %s1244 = scalar_lea.vmem [#allocation2], %s1243
          %1245 = dma.done %s1241, 256
        $region80: #{tpu_custom_call.1} parent=75 // pred_fallthru
          _
        // Predicated region
        $region81: #{tpu_custom_call.1} parent=75 // pred_check
          %p1246 = pneg %p321
        $region82: #{tpu_custom_call.1} parent=75 // pred_check_branch
          %1248 = sbr.rel (%p1246) target = $region84
        $region83: #{tpu_custom_call.1} parent=75 // pred_region
          %s1249 = sand.u32 %s306, 1
          %s1250 = scalar_lea.sflag [#allocation5], %s1249
          %s1251 = sand.u32 %s306, 1
          %s1252 = smul.addr %s1251, 8
          %s1253 = scalar_lea.vmem [#allocation4], %s1252
          %1254 = dma.done %s1250, 128
        $region84: #{tpu_custom_call.1} parent=75 // pred_fallthru
          _
      $region76: #{tpu_custom_call.1} parent=5 // pred_fallthru
        _
    $region6: #{tpu_custom_call.1} parent=1 // loop_footer
      %s27 = sadd.s32 1, %s23
    $region7: #{tpu_custom_call.1} parent=1 // loop_footer_branch
      %22 = sbr.rel target = $region3
    $region8: #{tpu_custom_call.1} parent=1 // loop_exit
      _
    %1255 = vsyncpa [#allocation3], 1
    %s1256 = scalar_lea.sflag [#allocation3], 1
    %1257 = vsyncpa %s1256, 1
    %1258 = vsyncpa [#allocation5], 1
    %s1259 = scalar_lea.sflag [#allocation5], 1
    %1260 = vsyncpa %s1259, 1

</llo_original>
